<compile_context>
chip_gen: v6e
topology: v6e:2x2x1
jax: 0.10.0
libtpu: 0.0.40
codegen_flags: <defaults>
</compile_context>

<pallas_src>
import jax
import jax.numpy as jnp
from jax.experimental import pallas as pl
from jax.experimental.pallas import tpu as pltpu

# ----------------------------- config (small) -----------------------------
BATCH = 8
INPUT_DIM = 64
HIDDEN_DIM = 128
OUTPUT_DIM = 16
NUM_LAYERS = 3
NUM_TASKS = 4
TASK_EMB_DIM = 32
LN_EPS = 1e-5
OUT1 = OUTPUT_DIM + 1          # logits + value column
NUM_HEADS = NUM_TASKS + 1      # per-task heads + shared head
HEAD_BLK = 128                 # lane-aligned block per head in the fused head weight
BB = 8                         # batch tile (grid axis; "parallel" for megacore scaling)
SLAB_ROWS = 3 * NUM_LAYERS + NUM_HEADS


# ------------------------------- the kernel -------------------------------
def taskaware_kernel(x_ref, tid_ref, winx_ref, task_h_ref, wl_ref, wh_ref, slab_ref, out_ref):
    f32 = jnp.float32
    bf16 = jnp.bfloat16

    tid = tid_ref[...]                                              # [BB, 1] int32

    # In-kernel one-hots from the id column (no wrapper one_hot ops, no extra DMAs).
    emb_iota = jax.lax.broadcasted_iota(jnp.int32, (BB, NUM_TASKS), 1)
    oh_emb = (emb_iota == tid).astype(f32)                          # zero row if tid >= NUM_TASKS
    head_idx = jnp.minimum(tid, NUM_TASKS)                          # shared slot for tid >= NUM_TASKS
    head_iota = jax.lax.broadcasted_iota(jnp.int32, (BB, NUM_HEADS), 1)
    oh_head = (head_iota == head_idx).astype(f32)                   # [BB, NUM_HEADS]

    # input projection: x part (bf16 MXU) + folded per-task contribution (tiny f32 matmul).
    h = (jnp.dot(x_ref[...].astype(bf16), winx_ref[...], preferred_element_type=f32)
         + jnp.dot(oh_emb, task_h_ref[...], preferred_element_type=f32))

    slab = slab_ref[...]                                            # [SLAB_ROWS, H] f32

    # task_conditioned_layers: Linear -> LayerNorm (one-pass stats) -> ReLU -> Dropout(id)
    inv_h = 1.0 / HIDDEN_DIM
    for i in range(NUM_LAYERS):                                     # static unroll (L = 3)
        z = jnp.dot(h.astype(bf16), wl_ref[i], preferred_element_type=f32) + slab[i:i + 1, :]
        s1 = jnp.sum(z, axis=-1, keepdims=True)                     # independent reductions
        s2 = jnp.sum(z * z, axis=-1, keepdims=True)
        mu = s1 * inv_h
        var = s2 * inv_h - mu * mu
        zn = (z - mu) * jax.lax.rsqrt(var + LN_EPS)
        zn = zn * slab[NUM_LAYERS + i:NUM_LAYERS + i + 1, :] \
               + slab[2 * NUM_LAYERS + i:2 * NUM_LAYERS + i + 1, :]
        h = jnp.maximum(zn, 0.0)

    # fused heads: ONE matmul over all (per-task + shared) heads, 128-lane block per head.
    fused = jnp.dot(h.astype(bf16), wh_ref[...], preferred_element_type=f32)   # [BB, 5*128]
    acc = jnp.dot(oh_head, slab[3 * NUM_LAYERS:, :], preferred_element_type=f32)  # selected bias
    for t in range(NUM_HEADS):                                      # aligned slices, VPU combine
        acc = acc + oh_head[:, t:t + 1] * fused[:, t * HEAD_BLK:(t + 1) * HEAD_BLK]

    # single lane-dense output slab:  [ h (128) | logits|value padded (128) ]
    out_ref[:, 0:HIDDEN_DIM] = h
    out_ref[:, HIDDEN_DIM:HIDDEN_DIM + HEAD_BLK] = acc


# ------------------------------- wrapper -----------------------------------
@jax.jit
def task_aware_policy_forward(x, task_ids, kp):
    B = x.shape[0]
    assert B % BB == 0, "batch must be a multiple of the batch tile"
    tid_col = task_ids.reshape(B, 1).astype(jnp.int32)

    out = pl.pallas_call(
        taskaware_kernel,
        out_shape=jax.ShapeDtypeStruct((B, HIDDEN_DIM + HEAD_BLK), jnp.float32),
        grid=(B // BB,),
        in_specs=[
            pl.BlockSpec((BB, INPUT_DIM), lambda i: (i, 0)),
            pl.BlockSpec((BB, 1), lambda i: (i, 0)),
            pl.BlockSpec((INPUT_DIM, HIDDEN_DIM), lambda i: (0, 0)),
            pl.BlockSpec((NUM_TASKS, HIDDEN_DIM), lambda i: (0, 0)),
            pl.BlockSpec((NUM_LAYERS, HIDDEN_DIM, HIDDEN_DIM), lambda i: (0, 0, 0)),
            pl.BlockSpec((HIDDEN_DIM, NUM_HEADS * HEAD_BLK), lambda i: (0, 0)),
            pl.BlockSpec((SLAB_ROWS, HIDDEN_DIM), lambda i: (0, 0)),
        ],
        out_specs=pl.BlockSpec((BB, HIDDEN_DIM + HEAD_BLK), lambda i: (i, 0)),
        compiler_params=pltpu.CompilerParams(dimension_semantics=("parallel",)),
    )(x, tid_col, kp["winx"], kp["task_h"], kp["wl"], kp["wh"], kp["slab"])

    h = out[:, :HIDDEN_DIM]
    logits = out[:, HIDDEN_DIM:HIDDEN_DIM + OUTPUT_DIM]
    values = out[:, HIDDEN_DIM + OUTPUT_DIM]
    task_embeds = jnp.take(kp["emb"], task_ids, axis=0)   # gather, no redundant one-hot matmul
    return {
        "logits": logits,
        "values": values,
        "hidden_states": h,
        "task_ids": task_ids,
        "task_embeddings": task_embeds,
    }


# --------------------------- deterministic params ---------------------------
def init_params(key):
    ks = jax.random.split(key, 12)

    def w(k, shape, scale=0.05):
        return jax.random.normal(k, shape, jnp.float32) * scale

    return {
        "emb":  w(ks[0], (NUM_TASKS, TASK_EMB_DIM), 0.1),
        "wtp":  w(ks[1], (TASK_EMB_DIM, HIDDEN_DIM)),
        "btp":  w(ks[2], (HIDDEN_DIM,), 0.01),
        "winx": w(ks[3], (INPUT_DIM, HIDDEN_DIM)),          # input_projection, x block
        "wint": w(ks[4], (HIDDEN_DIM, HIDDEN_DIM)),         # input_projection, task-feature block
        "bin":  w(ks[5], (HIDDEN_DIM,), 0.01),
        "wl":   w(ks[6], (NUM_LAYERS, HIDDEN_DIM, HIDDEN_DIM)),
        "bl":   w(ks[7], (NUM_LAYERS, HIDDEN_DIM), 0.01),
        "g":    1.0 + w(ks[8], (NUM_LAYERS, HIDDEN_DIM), 0.01),
        "beta": w(ks[9], (NUM_LAYERS, HIDDEN_DIM), 0.01),
        # NUM_TASKS task heads + 1 shared head; columns = (output_dim | value)
        "wh":   w(ks[10], (NUM_HEADS, HIDDEN_DIM, OUT1)),
        "bh":   w(ks[11], (NUM_HEADS, OUT1), 0.01),
    }


def prepare_kernel_params(p):
    """One-time param prep: fold the task chain, fuse+pad heads, pack small tensors, quantize."""
    bf16 = jnp.bfloat16
    # folded per-task hidden contribution (includes input_projection bias)
    task_h = (p["emb"] @ p["wtp"] + p["btp"]) @ p["wint"] + p["bin"]            # [T, H] f32
    # fused head weight: column t*128 + o = head t, output column o (rest zero)
    wh_pad = jnp.pad(p["wh"], ((0, 0), (0, 0), (0, HEAD_BLK - OUT1)))           # [T+1, H, 128]
    wh_fused = jnp.transpose(wh_pad, (1, 0, 2)).reshape(HIDDEN_DIM, NUM_HEADS * HEAD_BLK)
    bh_pad = jnp.pad(p["bh"], ((0, 0), (0, HEAD_BLK - OUT1)))                   # [T+1, 128]
    slab = jnp.concatenate([p["bl"], p["g"], p["beta"], bh_pad], axis=0)        # [3L+T+1, H]
    return {
        "winx": p["winx"].astype(bf16),
        "task_h": task_h.astype(jnp.float32),
        "wl": p["wl"].astype(bf16),
        "wh": wh_fused.astype(bf16),
        "slab": slab.astype(jnp.float32),
        "emb": p["emb"],
    }


# ------------------------------ pure-JAX reference --------------------------
def ref_forward(x, task_ids, p):
    """Module-structured reference using the same bf16-quantized matmul weights (f32 accumulate)."""
    f32, bf16 = jnp.float32, jnp.bfloat16
    temb = p["emb"][task_ids]
    tf = temb @ p["wtp"] + p["btp"]
    h = (jnp.dot(x.astype(bf16), p["winx"].astype(bf16), preferred_element_type=f32)
         + tf @ p["wint"] + p["bin"])
    for i in range(NUM_LAYERS):
        z = jnp.dot(h.astype(bf16), p["wl"][i].astype(bf16),
                    preferred_element_type=f32) + p["bl"][i]
        mu = z.mean(-1, keepdims=True)
        var = ((z - mu) ** 2).mean(-1, keepdims=True)
        z = (z - mu) / jnp.sqrt(var + LN_EPS) * p["g"][i] + p["beta"][i]
        h = jnp.maximum(z, 0.0)
    idx = jnp.minimum(task_ids, NUM_TASKS)                  # per-sample head (shared slot = T)
    wsel = p["wh"][idx].astype(bf16)                        # [B, H, OUT1]
    out = jnp.einsum("bh,bho->bo", h.astype(bf16), wsel,
                     preferred_element_type=f32) + p["bh"][idx]
    return out[:, :OUTPUT_DIM], out[:, OUTPUT_DIM], h


# ----------------------------------- main -----------------------------------
if __name__ == "__main__":
    key = jax.random.PRNGKey(0)
    kx, kparam = jax.random.split(key)

    x = jax.random.normal(kx, (BATCH, INPUT_DIM), jnp.float32)
    task_ids = jnp.array([0, 1, 2, 3, 0, 1, 2, 3], dtype=jnp.int32)

    base_params = init_params(kparam)
    kernel_params = prepare_kernel_params(base_params)

    out = task_aware_policy_forward(x, task_ids, kernel_params)
    jax.block_until_ready(out)

    # correctness check against the module-structured reference
    ref_logits, ref_values, ref_h = ref_forward(x, task_ids, base_params)
    assert jnp.allclose(out["logits"], ref_logits, atol=1e-3, rtol=1e-3)
    assert jnp.allclose(out["values"], ref_values, atol=1e-3, rtol=1e-3)
    assert jnp.allclose(out["hidden_states"], ref_h, atol=1e-3, rtol=1e-3)
    assert out["logits"].shape == (BATCH, OUTPUT_DIM)
    assert out["values"].shape == (BATCH,)
    assert out["hidden_states"].shape == (BATCH, HIDDEN_DIM)
    assert out["task_embeddings"].shape == (BATCH, TASK_EMB_DIM)

    print("KERNEL_OK")
</pallas_src>

<mosaic_0001>
module attributes {stable_mosaic.version = 11 : i64} {
  func.func @taskaware_kernel(%arg0: i32, %arg1: memref<8x64xf32, #tpu.memory_space<vmem>>, %arg2: memref<8x1xi32, #tpu.memory_space<vmem>>, %arg3: memref<64x128xbf16, #tpu.memory_space<vmem>>, %arg4: memref<4x128xf32, #tpu.memory_space<vmem>>, %arg5: memref<3x128x128xbf16, #tpu.memory_space<vmem>>, %arg6: memref<128x640xbf16, #tpu.memory_space<vmem>>, %arg7: memref<14x128xf32, #tpu.memory_space<vmem>>, %arg8: memref<8x256xf32, #tpu.memory_space<vmem>>) attributes {dimension_semantics = [#tpu.dimension_semantics<parallel>], iteration_bounds = array<i64: 1>, scalar_prefetch = 0 : i64, scratch_operands = 0 : i64, tpu.core_type = #tpu.core_type<tc>, window_params = [{transform_indices = @transform_0, window_bounds = array<i64: 8, 64>}, {transform_indices = @transform_1, window_bounds = array<i64: 8, 1>}, {pipeline_mode = #tpu.pipeline_mode<synchronous>, transform_indices = @transform_2, window_bounds = array<i64: 64, 128>}, {pipeline_mode = #tpu.pipeline_mode<synchronous>, transform_indices = @transform_3, window_bounds = array<i64: 4, 128>}, {pipeline_mode = #tpu.pipeline_mode<synchronous>, transform_indices = @transform_4, window_bounds = array<i64: 3, 128, 128>}, {pipeline_mode = #tpu.pipeline_mode<synchronous>, transform_indices = @transform_5, window_bounds = array<i64: 128, 640>}, {pipeline_mode = #tpu.pipeline_mode<synchronous>, transform_indices = @transform_6, window_bounds = array<i64: 14, 128>}, {transform_indices = @transform_7, window_bounds = array<i64: 8, 256>}]} {
    %c0 = arith.constant 0 : index
    %c0_0 = arith.constant 0 : index
    %0 = vector.load %arg2[%c0, %c0_0] : memref<8x1xi32, #tpu.memory_space<vmem>>, vector<8x1xi32>
    %1 = tpu.iota {dimensions = array<i32: 1>} : vector<8x4xi32>
    %2 = vector.broadcast %0 : vector<8x1xi32> to vector<8x4xi32>
    %3 = arith.cmpi eq, %1, %2 : vector<8x4xi32>
    %4 = arith.extui %3 : vector<8x4xi1> to vector<8x4xi32>
    %5 = arith.sitofp %4 : vector<8x4xi32> to vector<8x4xf32>
    %c4_i32 = arith.constant 4 : i32
    %6 = vector.broadcast %c4_i32 : i32 to vector<8x1xi32>
    %7 = arith.minsi %0, %6 : vector<8x1xi32>
    %8 = tpu.iota {dimensions = array<i32: 1>} : vector<8x5xi32>
    %9 = vector.broadcast %7 : vector<8x1xi32> to vector<8x5xi32>
    %10 = arith.cmpi eq, %8, %9 : vector<8x5xi32>
    %11 = arith.extui %10 : vector<8x5xi1> to vector<8x5xi32>
    %12 = arith.sitofp %11 : vector<8x5xi32> to vector<8x5xf32>
    %c0_1 = arith.constant 0 : index
    %c0_2 = arith.constant 0 : index
    %13 = vector.load %arg1[%c0_1, %c0_2] : memref<8x64xf32, #tpu.memory_space<vmem>>, vector<8x64xf32>
    %14 = arith.truncf %13 : vector<8x64xf32> to vector<8x64xbf16>
    %c0_3 = arith.constant 0 : index
    %c0_4 = arith.constant 0 : index
    %15 = vector.load %arg3[%c0_3, %c0_4] : memref<64x128xbf16, #tpu.memory_space<vmem>>, vector<64x128xbf16>
    %cst = arith.constant dense<0.000000e+00> : vector<8x128xf32>
    %16 = tpu.matmul %14, %15, %cst {dimension_numbers = #tpu.dot_dimension_numbers<[1], [0], [0], [1], [0, 0, 1, 1], [], []>} : vector<8x64xbf16>, vector<64x128xbf16>, vector<8x128xf32> -> vector<8x128xf32>
    %c0_5 = arith.constant 0 : index
    %c0_6 = arith.constant 0 : index
    %17 = vector.load %arg4[%c0_5, %c0_6] : memref<4x128xf32, #tpu.memory_space<vmem>>, vector<4x128xf32>
    %cst_7 = arith.constant dense<0.000000e+00> : vector<8x128xf32>
    %18 = tpu.matmul %5, %17, %cst_7 {dimension_numbers = #tpu.dot_dimension_numbers<[1], [0], [0], [1], [0, 0, 1, 1], [], []>} : vector<8x4xf32>, vector<4x128xf32>, vector<8x128xf32> -> vector<8x128xf32>
    %19 = arith.addf %16, %18 : vector<8x128xf32>
    %c0_8 = arith.constant 0 : index
    %c0_9 = arith.constant 0 : index
    %20 = vector.load %arg7[%c0_8, %c0_9] : memref<14x128xf32, #tpu.memory_space<vmem>>, vector<14x128xf32>
    %21 = arith.truncf %19 : vector<8x128xf32> to vector<8x128xbf16>
    %c0_10 = arith.constant 0 : index
    %c0_11 = arith.constant 0 : index
    %c0_12 = arith.constant 0 : index
    %22 = vector.load %arg5[%c0_10, %c0_11, %c0_12] : memref<3x128x128xbf16, #tpu.memory_space<vmem>>, vector<1x128x128xbf16>
    %23 = vector.shape_cast %22 : vector<1x128x128xbf16> to vector<128x128xbf16>
    %cst_13 = arith.constant dense<0.000000e+00> : vector<8x128xf32>
    %24 = tpu.matmul %21, %23, %cst_13 {dimension_numbers = #tpu.dot_dimension_numbers<[1], [0], [0], [1], [0, 0, 1, 1], [], []>} : vector<8x128xbf16>, vector<128x128xbf16>, vector<8x128xf32> -> vector<8x128xf32>
    %25 = vector.extract_strided_slice %20 {offsets = [0, 0], sizes = [1, 128], strides = [1, 1]} : vector<14x128xf32> to vector<1x128xf32>
    %26 = vector.broadcast %25 : vector<1x128xf32> to vector<8x128xf32>
    %27 = arith.addf %24, %26 : vector<8x128xf32>
    %cst_14 = arith.constant dense<0.000000e+00> : vector<8xf32>
    %28 = vector.multi_reduction <add>, %27, %cst_14 [1] : vector<8x128xf32> to vector<8xf32>
    %29 = vector.shape_cast %28 : vector<8xf32> to vector<8x1xf32>
    %30 = arith.mulf %27, %27 : vector<8x128xf32>
    %cst_15 = arith.constant dense<0.000000e+00> : vector<8xf32>
    %31 = vector.multi_reduction <add>, %30, %cst_15 [1] : vector<8x128xf32> to vector<8xf32>
    %32 = vector.shape_cast %31 : vector<8xf32> to vector<8x1xf32>
    %cst_16 = arith.constant 7.812500e-03 : f32
    %33 = vector.broadcast %cst_16 : f32 to vector<8x1xf32>
    %34 = arith.mulf %29, %33 : vector<8x1xf32>
    %cst_17 = arith.constant 7.812500e-03 : f32
    %35 = vector.broadcast %cst_17 : f32 to vector<8x1xf32>
    %36 = arith.mulf %32, %35 : vector<8x1xf32>
    %37 = arith.mulf %34, %34 : vector<8x1xf32>
    %38 = arith.subf %36, %37 : vector<8x1xf32>
    %39 = vector.broadcast %34 : vector<8x1xf32> to vector<8x128xf32>
    %40 = arith.subf %27, %39 : vector<8x128xf32>
    %cst_18 = arith.constant 9.99999974E-6 : f32
    %41 = vector.broadcast %cst_18 : f32 to vector<8x1xf32>
    %42 = arith.addf %38, %41 : vector<8x1xf32>
    %43 = math.rsqrt %42 : vector<8x1xf32>
    %44 = vector.broadcast %43 : vector<8x1xf32> to vector<8x128xf32>
    %45 = arith.mulf %40, %44 : vector<8x128xf32>
    %46 = vector.extract_strided_slice %20 {offsets = [3, 0], sizes = [1, 128], strides = [1, 1]} : vector<14x128xf32> to vector<1x128xf32>
    %47 = vector.broadcast %46 : vector<1x128xf32> to vector<8x128xf32>
    %48 = arith.mulf %45, %47 : vector<8x128xf32>
    %49 = vector.extract_strided_slice %20 {offsets = [6, 0], sizes = [1, 128], strides = [1, 1]} : vector<14x128xf32> to vector<1x128xf32>
    %50 = vector.broadcast %49 : vector<1x128xf32> to vector<8x128xf32>
    %51 = arith.addf %48, %50 : vector<8x128xf32>
    %cst_19 = arith.constant 0.000000e+00 : f32
    %52 = vector.broadcast %cst_19 : f32 to vector<8x128xf32>
    %53 = arith.maximumf %51, %52 : vector<8x128xf32>
    %54 = arith.truncf %53 : vector<8x128xf32> to vector<8x128xbf16>
    %c1 = arith.constant 1 : index
    %c0_20 = arith.constant 0 : index
    %c0_21 = arith.constant 0 : index
    %55 = vector.load %arg5[%c1, %c0_20, %c0_21] : memref<3x128x128xbf16, #tpu.memory_space<vmem>>, vector<1x128x128xbf16>
    %56 = vector.shape_cast %55 : vector<1x128x128xbf16> to vector<128x128xbf16>
    %cst_22 = arith.constant dense<0.000000e+00> : vector<8x128xf32>
    %57 = tpu.matmul %54, %56, %cst_22 {dimension_numbers = #tpu.dot_dimension_numbers<[1], [0], [0], [1], [0, 0, 1, 1], [], []>} : vector<8x128xbf16>, vector<128x128xbf16>, vector<8x128xf32> -> vector<8x128xf32>
    %58 = vector.extract_strided_slice %20 {offsets = [1, 0], sizes = [1, 128], strides = [1, 1]} : vector<14x128xf32> to vector<1x128xf32>
    %59 = vector.broadcast %58 : vector<1x128xf32> to vector<8x128xf32>
    %60 = arith.addf %57, %59 : vector<8x128xf32>
    %cst_23 = arith.constant dense<0.000000e+00> : vector<8xf32>
    %61 = vector.multi_reduction <add>, %60, %cst_23 [1] : vector<8x128xf32> to vector<8xf32>
    %62 = vector.shape_cast %61 : vector<8xf32> to vector<8x1xf32>
    %63 = arith.mulf %60, %60 : vector<8x128xf32>
    %cst_24 = arith.constant dense<0.000000e+00> : vector<8xf32>
    %64 = vector.multi_reduction <add>, %63, %cst_24 [1] : vector<8x128xf32> to vector<8xf32>
    %65 = vector.shape_cast %64 : vector<8xf32> to vector<8x1xf32>
    %cst_25 = arith.constant 7.812500e-03 : f32
    %66 = vector.broadcast %cst_25 : f32 to vector<8x1xf32>
    %67 = arith.mulf %62, %66 : vector<8x1xf32>
    %cst_26 = arith.constant 7.812500e-03 : f32
    %68 = vector.broadcast %cst_26 : f32 to vector<8x1xf32>
    %69 = arith.mulf %65, %68 : vector<8x1xf32>
    %70 = arith.mulf %67, %67 : vector<8x1xf32>
    %71 = arith.subf %69, %70 : vector<8x1xf32>
    %72 = vector.broadcast %67 : vector<8x1xf32> to vector<8x128xf32>
    %73 = arith.subf %60, %72 : vector<8x128xf32>
    %cst_27 = arith.constant 9.99999974E-6 : f32
    %74 = vector.broadcast %cst_27 : f32 to vector<8x1xf32>
    %75 = arith.addf %71, %74 : vector<8x1xf32>
    %76 = math.rsqrt %75 : vector<8x1xf32>
    %77 = vector.broadcast %76 : vector<8x1xf32> to vector<8x128xf32>
    %78 = arith.mulf %73, %77 : vector<8x128xf32>
    %79 = vector.extract_strided_slice %20 {offsets = [4, 0], sizes = [1, 128], strides = [1, 1]} : vector<14x128xf32> to vector<1x128xf32>
    %80 = vector.broadcast %79 : vector<1x128xf32> to vector<8x128xf32>
    %81 = arith.mulf %78, %80 : vector<8x128xf32>
    %82 = vector.extract_strided_slice %20 {offsets = [7, 0], sizes = [1, 128], strides = [1, 1]} : vector<14x128xf32> to vector<1x128xf32>
    %83 = vector.broadcast %82 : vector<1x128xf32> to vector<8x128xf32>
    %84 = arith.addf %81, %83 : vector<8x128xf32>
    %cst_28 = arith.constant 0.000000e+00 : f32
    %85 = vector.broadcast %cst_28 : f32 to vector<8x128xf32>
    %86 = arith.maximumf %84, %85 : vector<8x128xf32>
    %87 = arith.truncf %86 : vector<8x128xf32> to vector<8x128xbf16>
    %c2 = arith.constant 2 : index
    %c0_29 = arith.constant 0 : index
    %c0_30 = arith.constant 0 : index
    %88 = vector.load %arg5[%c2, %c0_29, %c0_30] : memref<3x128x128xbf16, #tpu.memory_space<vmem>>, vector<1x128x128xbf16>
    %89 = vector.shape_cast %88 : vector<1x128x128xbf16> to vector<128x128xbf16>
    %cst_31 = arith.constant dense<0.000000e+00> : vector<8x128xf32>
    %90 = tpu.matmul %87, %89, %cst_31 {dimension_numbers = #tpu.dot_dimension_numbers<[1], [0], [0], [1], [0, 0, 1, 1], [], []>} : vector<8x128xbf16>, vector<128x128xbf16>, vector<8x128xf32> -> vector<8x128xf32>
    %91 = vector.extract_strided_slice %20 {offsets = [2, 0], sizes = [1, 128], strides = [1, 1]} : vector<14x128xf32> to vector<1x128xf32>
    %92 = vector.broadcast %91 : vector<1x128xf32> to vector<8x128xf32>
    %93 = arith.addf %90, %92 : vector<8x128xf32>
    %cst_32 = arith.constant dense<0.000000e+00> : vector<8xf32>
    %94 = vector.multi_reduction <add>, %93, %cst_32 [1] : vector<8x128xf32> to vector<8xf32>
    %95 = vector.shape_cast %94 : vector<8xf32> to vector<8x1xf32>
    %96 = arith.mulf %93, %93 : vector<8x128xf32>
    %cst_33 = arith.constant dense<0.000000e+00> : vector<8xf32>
    %97 = vector.multi_reduction <add>, %96, %cst_33 [1] : vector<8x128xf32> to vector<8xf32>
    %98 = vector.shape_cast %97 : vector<8xf32> to vector<8x1xf32>
    %cst_34 = arith.constant 7.812500e-03 : f32
    %99 = vector.broadcast %cst_34 : f32 to vector<8x1xf32>
    %100 = arith.mulf %95, %99 : vector<8x1xf32>
    %cst_35 = arith.constant 7.812500e-03 : f32
    %101 = vector.broadcast %cst_35 : f32 to vector<8x1xf32>
    %102 = arith.mulf %98, %101 : vector<8x1xf32>
    %103 = arith.mulf %100, %100 : vector<8x1xf32>
    %104 = arith.subf %102, %103 : vector<8x1xf32>
    %105 = vector.broadcast %100 : vector<8x1xf32> to vector<8x128xf32>
    %106 = arith.subf %93, %105 : vector<8x128xf32>
    %cst_36 = arith.constant 9.99999974E-6 : f32
    %107 = vector.broadcast %cst_36 : f32 to vector<8x1xf32>
    %108 = arith.addf %104, %107 : vector<8x1xf32>
    %109 = math.rsqrt %108 : vector<8x1xf32>
    %110 = vector.broadcast %109 : vector<8x1xf32> to vector<8x128xf32>
    %111 = arith.mulf %106, %110 : vector<8x128xf32>
    %112 = vector.extract_strided_slice %20 {offsets = [5, 0], sizes = [1, 128], strides = [1, 1]} : vector<14x128xf32> to vector<1x128xf32>
    %113 = vector.broadcast %112 : vector<1x128xf32> to vector<8x128xf32>
    %114 = arith.mulf %111, %113 : vector<8x128xf32>
    %115 = vector.extract_strided_slice %20 {offsets = [8, 0], sizes = [1, 128], strides = [1, 1]} : vector<14x128xf32> to vector<1x128xf32>
    %116 = vector.broadcast %115 : vector<1x128xf32> to vector<8x128xf32>
    %117 = arith.addf %114, %116 : vector<8x128xf32>
    %cst_37 = arith.constant 0.000000e+00 : f32
    %118 = vector.broadcast %cst_37 : f32 to vector<8x128xf32>
    %119 = arith.maximumf %117, %118 : vector<8x128xf32>
    %120 = arith.truncf %119 : vector<8x128xf32> to vector<8x128xbf16>
    %c0_38 = arith.constant 0 : index
    %c0_39 = arith.constant 0 : index
    %121 = vector.load %arg6[%c0_38, %c0_39] : memref<128x640xbf16, #tpu.memory_space<vmem>>, vector<128x640xbf16>
    %cst_40 = arith.constant dense<0.000000e+00> : vector<8x640xf32>
    %122 = tpu.matmul %120, %121, %cst_40 {dimension_numbers = #tpu.dot_dimension_numbers<[1], [0], [0], [1], [0, 0, 1, 1], [], []>} : vector<8x128xbf16>, vector<128x640xbf16>, vector<8x640xf32> -> vector<8x640xf32>
    %123 = vector.extract_strided_slice %20 {offsets = [9, 0], sizes = [5, 128], strides = [1, 1]} : vector<14x128xf32> to vector<5x128xf32>
    %cst_41 = arith.constant dense<0.000000e+00> : vector<8x128xf32>
    %124 = tpu.matmul %12, %123, %cst_41 {dimension_numbers = #tpu.dot_dimension_numbers<[1], [0], [0], [1], [0, 0, 1, 1], [], []>} : vector<8x5xf32>, vector<5x128xf32>, vector<8x128xf32> -> vector<8x128xf32>
    %125 = vector.extract_strided_slice %12 {offsets = [0, 0], sizes = [8, 1], strides = [1, 1]} : vector<8x5xf32> to vector<8x1xf32>
    %126 = vector.extract_strided_slice %122 {offsets = [0, 0], sizes = [8, 128], strides = [1, 1]} : vector<8x640xf32> to vector<8x128xf32>
    %127 = vector.broadcast %125 : vector<8x1xf32> to vector<8x128xf32>
    %128 = arith.mulf %127, %126 : vector<8x128xf32>
    %129 = arith.addf %124, %128 : vector<8x128xf32>
    %130 = vector.extract_strided_slice %12 {offsets = [0, 1], sizes = [8, 1], strides = [1, 1]} : vector<8x5xf32> to vector<8x1xf32>
    %131 = vector.extract_strided_slice %122 {offsets = [0, 128], sizes = [8, 128], strides = [1, 1]} : vector<8x640xf32> to vector<8x128xf32>
    %132 = vector.broadcast %130 : vector<8x1xf32> to vector<8x128xf32>
    %133 = arith.mulf %132, %131 : vector<8x128xf32>
    %134 = arith.addf %129, %133 : vector<8x128xf32>
    %135 = vector.extract_strided_slice %12 {offsets = [0, 2], sizes = [8, 1], strides = [1, 1]} : vector<8x5xf32> to vector<8x1xf32>
    %136 = vector.extract_strided_slice %122 {offsets = [0, 256], sizes = [8, 128], strides = [1, 1]} : vector<8x640xf32> to vector<8x128xf32>
    %137 = vector.broadcast %135 : vector<8x1xf32> to vector<8x128xf32>
    %138 = arith.mulf %137, %136 : vector<8x128xf32>
    %139 = arith.addf %134, %138 : vector<8x128xf32>
    %140 = vector.extract_strided_slice %12 {offsets = [0, 3], sizes = [8, 1], strides = [1, 1]} : vector<8x5xf32> to vector<8x1xf32>
    %141 = vector.extract_strided_slice %122 {offsets = [0, 384], sizes = [8, 128], strides = [1, 1]} : vector<8x640xf32> to vector<8x128xf32>
    %142 = vector.broadcast %140 : vector<8x1xf32> to vector<8x128xf32>
    %143 = arith.mulf %142, %141 : vector<8x128xf32>
    %144 = arith.addf %139, %143 : vector<8x128xf32>
    %145 = vector.extract_strided_slice %12 {offsets = [0, 4], sizes = [8, 1], strides = [1, 1]} : vector<8x5xf32> to vector<8x1xf32>
    %146 = vector.extract_strided_slice %122 {offsets = [0, 512], sizes = [8, 128], strides = [1, 1]} : vector<8x640xf32> to vector<8x128xf32>
    %147 = vector.broadcast %145 : vector<8x1xf32> to vector<8x128xf32>
    %148 = arith.mulf %147, %146 : vector<8x128xf32>
    %149 = arith.addf %144, %148 : vector<8x128xf32>
    %c0_42 = arith.constant 0 : index
    %c0_43 = arith.constant 0 : index
    %150 = vector.load %arg8[%c0_42, %c0_43] : memref<8x256xf32, #tpu.memory_space<vmem>>, vector<8x128xf32>
    tpu.vector_store %arg8[%c0_42, %c0_43], %119 {strides = array<i32>} : memref<8x256xf32, #tpu.memory_space<vmem>>, vector<8x128xf32>,
    %c0_44 = arith.constant 0 : index
    %c128 = arith.constant 128 : index
    %151 = vector.load %arg8[%c0_44, %c128] : memref<8x256xf32, #tpu.memory_space<vmem>>, vector<8x128xf32>
    tpu.vector_store %arg8[%c0_44, %c128], %149 {strides = array<i32>} : memref<8x256xf32, #tpu.memory_space<vmem>>, vector<8x128xf32>,
    return
  }
  func.func @transform_0(%arg0: i32) -> (i32, i32) {
    %c0_i32 = arith.constant 0 : i32
    %c0_i32_0 = arith.constant 0 : i32
    return %arg0, %c0_i32 : i32, i32
  }
  func.func @transform_1(%arg0: i32) -> (i32, i32) {
    %c0_i32 = arith.constant 0 : i32
    %c0_i32_0 = arith.constant 0 : i32
    return %arg0, %c0_i32 : i32, i32
  }
  func.func @transform_2(%arg0: i32) -> (i32, i32) {
    %c0_i32 = arith.constant 0 : i32
    %c0_i32_0 = arith.constant 0 : i32
    %c0_i32_1 = arith.constant 0 : i32
    return %c0_i32, %c0_i32_0 : i32, i32
  }
  func.func @transform_3(%arg0: i32) -> (i32, i32) {
    %c0_i32 = arith.constant 0 : i32
    %c0_i32_0 = arith.constant 0 : i32
    %c0_i32_1 = arith.constant 0 : i32
    return %c0_i32, %c0_i32_0 : i32, i32
  }
  func.func @transform_4(%arg0: i32) -> (i32, i32, i32) {
    %c0_i32 = arith.constant 0 : i32
    %c0_i32_0 = arith.constant 0 : i32
    %c0_i32_1 = arith.constant 0 : i32
    %c0_i32_2 = arith.constant 0 : i32
    return %c0_i32, %c0_i32_0, %c0_i32_1 : i32, i32, i32
  }
  func.func @transform_5(%arg0: i32) -> (i32, i32) {
    %c0_i32 = arith.constant 0 : i32
    %c0_i32_0 = arith.constant 0 : i32
    %c0_i32_1 = arith.constant 0 : i32
    return %c0_i32, %c0_i32_0 : i32, i32
  }
  func.func @transform_6(%arg0: i32) -> (i32, i32) {
    %c0_i32 = arith.constant 0 : i32
    %c0_i32_0 = arith.constant 0 : i32
    %c0_i32_1 = arith.constant 0 : i32
    return %c0_i32, %c0_i32_0 : i32, i32
  }
  func.func @transform_7(%arg0: i32) -> (i32, i32) {
    %c0_i32 = arith.constant 0 : i32
    %c0_i32_0 = arith.constant 0 : i32
    return %arg0, %c0_i32 : i32, i32
  }
}

</mosaic_0001>

<llo_original>
// kernel: task_aware_policy_forward.1
$region0: #{task_aware_policy_forward.1}
  #allocation0 [shape = 'u32[]', space=smem, size = 0x4, offset = 0x4, fixed_abs, tag = 'smem constant byte address 0x4 - core index']
  #allocation1 [shape = 'u32[144,128]{1,0:T(1,128)}', space=vmem, size = 0x12000, scoped, tag = 'internal scratch']
  %s0 = inlined_call_operand.vmem [shape: f32[8,64], index: 0, kind: input, shape index: {}]
  %s1 = inlined_call_operand.vmem [shape: s32[8,1], index: 1, kind: input, shape index: {}]
  %s2 = inlined_call_operand.hbm [shape: bf16[64,128], index: 2, kind: input, shape index: {}]
  %s3 = inlined_call_operand.vmem [shape: f32[4,128], index: 3, kind: input, shape index: {}]
  %s4 = inlined_call_operand.hbm [shape: bf16[3,128,128], index: 4, kind: input, shape index: {}]
  %s5 = inlined_call_operand.hbm [shape: bf16[128,640], index: 5, kind: input, shape index: {}]
  %s6 = inlined_call_operand.hbm [shape: f32[14,128], index: 6, kind: input, shape index: {}]
  %s7 = inlined_call_operand.vmem [shape: f32[8,256], index: 7, kind: output, shape index: {}]
  %s8 = sld [smem:[#allocation0]]
  $region54: #{task_aware_policy_forward.1} parent=0
    _
  %s10 = ssub.s32 1, %s8
  %s11 = scalar_select 0, %s10, %s8
  $region1: #{task_aware_policy_forward.1} parent=0
    #allocation2 [shape = 'u8[16384]{0}', space=vmem, size = 0x4000, scoped, tag = 'input window, operand 2, single buffered']
    #allocation3 [shape = 's32[1]{0}', space=sflag, size = 0x4, scoped, tag = 'scoped memory for task_aware_policy_forward.1']
    #allocation4 [shape = 'u8[98304]{0}', space=vmem, size = 0x18000, scoped, tag = 'input window, operand 4, single buffered']
    #allocation5 [shape = 's32[1]{0}', space=sflag, size = 0x4, scoped, tag = 'scoped memory for task_aware_policy_forward.1']
    #allocation6 [shape = 'u8[163840]{0}', space=vmem, size = 0x28000, scoped, tag = 'input window, operand 5, single buffered']
    #allocation7 [shape = 'u8[8192]{0}', space=vmem, size = 0x2000, scoped, tag = 'input window, operand 6, single buffered']
    #allocation8 [shape = 's32[1]{0}', space=sflag, size = 0x4, scoped, tag = 'scoped memory for task_aware_policy_forward.1']
    %12 = vsyncpa [#allocation3], 0
    %13 = vsyncpa [#allocation5], 0
    %14 = vsyncpa [#allocation8], 0
    // Predicated region
    $region2: #{task_aware_policy_forward.1} parent=1 // pred_check
      _
    $region3: #{task_aware_policy_forward.1} parent=1 // pred_check_branch
      %16 = sbr.rel (0) target = $region5
    $region4: #{task_aware_policy_forward.1} parent=1 // pred_region
      _
    $region5: #{task_aware_policy_forward.1} parent=1 // pred_fallthru
      _
    // Predicated region
    $region6: #{task_aware_policy_forward.1} parent=1 // pred_check
      _
    $region7: #{task_aware_policy_forward.1} parent=1 // pred_check_branch
      %18 = sbr.rel (0) target = $region9
    $region8: #{task_aware_policy_forward.1} parent=1 // pred_region
      _
    $region9: #{task_aware_policy_forward.1} parent=1 // pred_fallthru
      _
    // Predicated region
    $region10: #{task_aware_policy_forward.1} parent=1 // pred_check
      _
    $region11: #{task_aware_policy_forward.1} parent=1 // pred_check_branch
      %20 = sbr.rel (0) target = $region13
    $region12: #{task_aware_policy_forward.1} parent=1 // pred_region
      %s22 = ssub.s32 512, 512
      %23 = vsyncadd [#allocation3], %s22
      %s24 = sshll.u32 [#allocation2], 4
      %s25 = int_to_ptr.vmem [resolvable:$true] %s24
      %30 = dma.hbm_to_vmem [thread:$0]  %s2, 512, %s25, [#allocation3], 64, 64, 4
    $region13: #{task_aware_policy_forward.1} parent=1 // pred_fallthru
      _
    // Predicated region
    $region14: #{task_aware_policy_forward.1} parent=1 // pred_check
      _
    $region15: #{task_aware_policy_forward.1} parent=1 // pred_check_branch
      %32 = sbr.rel (0) target = $region17
    $region16: #{task_aware_policy_forward.1} parent=1 // pred_region
      _
    $region17: #{task_aware_policy_forward.1} parent=1 // pred_fallthru
      _
    // Predicated region
    $region18: #{task_aware_policy_forward.1} parent=1 // pred_check
      _
    $region19: #{task_aware_policy_forward.1} parent=1 // pred_check_branch
      %34 = sbr.rel (0) target = $region21
    $region20: #{task_aware_policy_forward.1} parent=1 // pred_region
      %s36 = ssub.s32 3072, 3072
      %37 = vsyncadd [#allocation5], %s36
      %s38 = sshll.u32 [#allocation4], 4
      %s39 = int_to_ptr.vmem [resolvable:$true] %s38
      %44 = dma.hbm_to_vmem [thread:$0]  %s4, 3072, %s39, [#allocation5], 64, 64, 4
    $region21: #{task_aware_policy_forward.1} parent=1 // pred_fallthru
      _
    // Predicated region
    $region22: #{task_aware_policy_forward.1} parent=1 // pred_check
      _
    $region23: #{task_aware_policy_forward.1} parent=1 // pred_check_branch
      %46 = sbr.rel (0) target = $region25
    $region24: #{task_aware_policy_forward.1} parent=1 // pred_region
      %s48 = ssub.s32 5120, 5120
      %49 = vsyncadd [#allocation5], %s48
      %s50 = sshll.u32 [#allocation6], 4
      %s51 = int_to_ptr.vmem [resolvable:$true] %s50
      %56 = dma.hbm_to_vmem [thread:$0]  %s5, 5120, %s51, [#allocation5], 320, 320, 20
    $region25: #{task_aware_policy_forward.1} parent=1 // pred_fallthru
      _
    // Predicated region
    $region26: #{task_aware_policy_forward.1} parent=1 // pred_check
      _
    $region27: #{task_aware_policy_forward.1} parent=1 // pred_check_branch
      %58 = sbr.rel (0) target = $region29
    $region28: #{task_aware_policy_forward.1} parent=1 // pred_region
      %s60 = ssub.s32 256, 256
      %61 = vsyncadd [#allocation8], %s60
      %s62 = sshll.u32 [#allocation7], 4
      %s63 = int_to_ptr.vmem [resolvable:$true] %s62
      %68 = dma.hbm_to_vmem [thread:$0]  %s6, 256, %s63, [#allocation8], 128, 128, 8
    $region29: #{task_aware_policy_forward.1} parent=1 // pred_fallthru
      _
    // Predicated region
    $region30: #{task_aware_policy_forward.1} parent=1 // pred_check
      _
    $region31: #{task_aware_policy_forward.1} parent=1 // pred_check_branch
      %70 = sbr.rel (0) target = $region33
    $region32: #{task_aware_policy_forward.1} parent=1 // pred_region
      %71 = dma.done [#allocation3], 512
    $region33: #{task_aware_policy_forward.1} parent=1 // pred_fallthru
      _
    // Predicated region
    $region34: #{task_aware_policy_forward.1} parent=1 // pred_check
      _
    $region35: #{task_aware_policy_forward.1} parent=1 // pred_check_branch
      %73 = sbr.rel (0) target = $region37
    $region36: #{task_aware_policy_forward.1} parent=1 // pred_region
      %74 = dma.done [#allocation5], 3072
    $region37: #{task_aware_policy_forward.1} parent=1 // pred_fallthru
      _
    // Predicated region
    $region38: #{task_aware_policy_forward.1} parent=1 // pred_check
      _
    $region39: #{task_aware_policy_forward.1} parent=1 // pred_check_branch
      %76 = sbr.rel (0) target = $region41
    $region40: #{task_aware_policy_forward.1} parent=1 // pred_region
      %77 = dma.done [#allocation5], 5120
    $region41: #{task_aware_policy_forward.1} parent=1 // pred_fallthru
      _
    // Predicated region
    $region42: #{task_aware_policy_forward.1} parent=1 // pred_check
      _
    $region43: #{task_aware_policy_forward.1} parent=1 // pred_check_branch
      %79 = sbr.rel (0) target = $region45
    $region44: #{task_aware_policy_forward.1} parent=1 // pred_region
      %80 = dma.done [#allocation8], 256
    $region45: #{task_aware_policy_forward.1} parent=1 // pred_fallthru
      _
    %v82 = vld [vmem:[%s1] sm:$0xff]
    %v83 = vlaneseq
    %v84 = vand.u32 %v83, 127
    %85 = vset.pattern.permute.xlu0 0
    %86 = vperm.xlu0 %85, %v82
    %v87 = vpop.permute.xlu0 %86
    %vm88 = vcmp.eq.s32.totalorder %v84, %v87
    %v89 = vsel %vm88, 1, 0
    %v90 = vcvt.s32.f32 %v89
    %vm91 = vcmp.lt.s32.totalorder %v82, 4
    %v92 = vsel %vm91, %v82, 4
    %93 = vset.pattern.permute.xlu0 0
    %94 = vperm.xlu0 %93, %v92
    %v95 = vpop.permute.xlu0 %94
    %vm96 = vcmp.eq.s32.totalorder %v84, %v95
    %v97 = vsel %vm96, 1, 0
    %v98 = vcvt.s32.f32 %v97
    %v99 = vld [vmem:[%s0] sm:$0xff]
    %v100 = vpack.c.bf16 %v99, %v99
    %v101 = vld [vmem:[#allocation2] sm:$0xf]
    %v102 = vld [vmem:[#allocation2 + $0x4] sm:$0xf]
    %v103 = vld [vmem:[#allocation2 + $0x8] sm:$0xf]
    %v104 = vld [vmem:[#allocation2 + $0xc] sm:$0xf]
    %v105 = vld [vmem:[#allocation2 + $0x10] sm:$0xf]
    %v106 = vld [vmem:[#allocation2 + $0x14] sm:$0xf]
    %v107 = vld [vmem:[#allocation2 + $0x18] sm:$0xf]
    %v108 = vld [vmem:[#allocation2 + $0x1c] sm:$0xf]
    %v109 = vld [vmem:[%s3] sm:$0xf]
    %vm110 = vcmask 31744
    %v112 = vsel %vm110, %v90, 0
    %vm114 = vcmask 1043456
    %v116 = vsel %vm114, %v109, 0
    %118 = vmatprep.subr.mxu0 0.0
    %119 = vmatpush1.msra.mxu0 0.0
    %120 = vmatprep.subr.mxu0 0.0
    %121 = vmatpush1.msra.mxu0 0.0
    %122 = vmatprep.subr.mxu0 0.0
    %123 = vmatpush1.msra.mxu0 0.0
    %124 = vmatprep.subr.mxu0 0.0
    %125 = vmatpush1.msra.mxu0 0.0
    %126 = vmatprep.subr.mxu0 0.0
    %127 = vmatpush1.msra.mxu0 0.0
    %128 = vmatprep.subr.mxu0 0.0
    %129 = vmatpush1.msra.mxu0 0.0
    %130 = vmatprep.subr.mxu0 0.0
    %131 = vmatpush1.msra.mxu0 0.0
    %132 = vmatprep.subr.mxu0 0.0
    %133 = vmatpush1.msra.mxu0 0.0
    %134 = vmatprep.subr.mxu0 0.0
    %135 = vmatpush1.msra.mxu0 0.0
    %136 = vmatprep.subr.mxu0 0.0
    %137 = vmatpush1.msra.mxu0 0.0
    %138 = vmatprep.subr.mxu0 0.0
    %139 = vmatpush1.msra.mxu0 0.0
    %140 = vmatprep.subr.mxu0 0.0
    %141 = vmatpush1.msra.mxu0 0.0
    %142 = vmatprep.subr.mxu0 0.0
    %143 = vmatpush1.msra.mxu0 0.0
    %144 = vmatprep.subr.mxu0 0.0
    %145 = vmatpush1.msra.mxu0 0.0
    %146 = vmatprep.subr.mxu0 0.0
    %147 = vmatpush1.msra.mxu0 0.0
    %148 = vmatprep.subr.mxu0 0.0
    %149 = vmatpush1.msra.mxu0 %v116
    %150 = vmatprep.subr.mxu0 0.0
    %151 = vmatpush2.msra.mxu0 0.0
    %152 = vmatprep.subr.mxu0 0.0
    %153 = vmatpush2.msra.mxu0 0.0
    %154 = vmatprep.subr.mxu0 0.0
    %155 = vmatpush2.msra.mxu0 0.0
    %156 = vmatprep.subr.mxu0 0.0
    %157 = vmatpush2.msra.mxu0 0.0
    %158 = vmatprep.subr.mxu0 0.0
    %159 = vmatpush2.msra.mxu0 0.0
    %160 = vmatprep.subr.mxu0 0.0
    %161 = vmatpush2.msra.mxu0 0.0
    %162 = vmatprep.subr.mxu0 0.0
    %163 = vmatpush2.msra.mxu0 0.0
    %164 = vmatprep.subr.mxu0 0.0
    %165 = vmatpush2.msra.mxu0 0.0
    %166 = vmatprep.subr.mxu0 0.0
    %167 = vmatpush2.msra.mxu0 0.0
    %168 = vmatprep.subr.mxu0 0.0
    %169 = vmatpush2.msra.mxu0 0.0
    %170 = vmatprep.subr.mxu0 0.0
    %171 = vmatpush2.msra.mxu0 0.0
    %172 = vmatprep.subr.mxu0 0.0
    %173 = vmatpush2.msra.mxu0 0.0
    %174 = vmatprep.subr.mxu0 0.0
    %175 = vmatpush2.msra.mxu0 0.0
    %176 = vmatprep.subr.mxu0 0.0
    %177 = vmatpush2.msra.mxu0 0.0
    %178 = vmatprep.subr.mxu0 0.0
    %179 = vmatpush2.msra.mxu0 0.0
    %180 = vmatprep.subr.mxu0 0.0
    %181 = vmatpush2.msra.mxu0 0.0
    %182 = vmatprep.mubr.f32.mxu0 0.0
    %183 = vmatmul.mubr.f32.gmra.mxu0 %v112
    %v184 = vpop.f32.mrf.mxu0
    %v185 = vadd.f32 0.0, %v184
    %v186 = vpop.f32.mrf.mxu0
    %187 = vdwg.mxu0
    %v196 = vunpack.c.l.b16 %v101
    %v197 = vunpack.c.l.b16 %v102
    %v198 = vunpack.c.l.b16 %v103
    %v199 = vunpack.c.l.b16 %v104
    %v200 = vunpack.c.l.b16 %v105
    %v201 = vunpack.c.l.b16 %v106
    %v202 = vunpack.c.l.b16 %v107
    %v203 = vunpack.c.l.b16 %v108
    %v204 = vpack.c.b16 %v197, %v196
    %v205 = vpack.c.b16 %v199, %v198
    %v206 = vpack.c.b16 %v201, %v200
    %v207 = vpack.c.b16 %v203, %v202
    %vm212 = vcmask 523264
    %v214 = vsel %vm212, %v100, 0
    %216 = vmatprep.subr.bf16.mxu0 0
    %217 = vmatpush1.bf16.msra.mxu0 0
    %218 = vmatprep.subr.bf16.mxu0 0
    %219 = vmatpush1.bf16.msra.mxu0 0
    %220 = vmatprep.subr.bf16.mxu0 0
    %221 = vmatpush1.bf16.msra.mxu0 0
    %222 = vmatprep.subr.bf16.mxu0 0
    %223 = vmatpush1.bf16.msra.mxu0 0
    %224 = vmatprep.subr.bf16.mxu0 0
    %225 = vmatpush1.bf16.msra.mxu0 %v207
    %226 = vmatprep.subr.bf16.mxu0 0
    %227 = vmatpush1.bf16.msra.mxu0 %v206
    %228 = vmatprep.subr.bf16.mxu0 0
    %229 = vmatpush1.bf16.msra.mxu0 %v205
    %230 = vmatprep.subr.bf16.mxu0 0
    %231 = vmatpush1.bf16.msra.mxu0 %v204
    %232 = vmatprep.subr.bf16.mxu0 0
    %233 = vmatpush2.bf16.msra.mxu0 0
    %234 = vmatprep.subr.bf16.mxu0 0
    %235 = vmatpush2.bf16.msra.mxu0 0
    %236 = vmatprep.subr.bf16.mxu0 0
    %237 = vmatpush2.bf16.msra.mxu0 0
    %238 = vmatprep.subr.bf16.mxu0 0
    %239 = vmatpush2.bf16.msra.mxu0 0
    %240 = vmatprep.subr.bf16.mxu0 0
    %241 = vmatpush2.bf16.msra.mxu0 0
    %242 = vmatprep.subr.bf16.mxu0 0
    %243 = vmatpush2.bf16.msra.mxu0 0
    %244 = vmatprep.subr.bf16.mxu0 0
    %245 = vmatpush2.bf16.msra.mxu0 0
    %246 = vmatprep.subr.bf16.mxu0 0
    %247 = vmatpush2.bf16.msra.mxu0 0
    %248 = vmatprep.mubr.bf16.mxu0 0
    %249 = vmatmul.mubr.bf16.gmra.mxu0 %v214
    %v250 = vpop.f32.mrf.mxu0
    %v251 = vadd.f32 %v185, %v250
    %v252 = vpop.f32.mrf.mxu0
    %v253 = vpop.f32.mrf.mxu0
    %v254 = vpop.f32.mrf.mxu0
    %255 = vdwg.mxu0
    %v256 = vld [vmem:[#allocation7] sm:$0xff]
    %v257 = vld [vmem:[#allocation7 + $0x8] sm:$0x3f]
    %v258 = vpack.c.bf16 %v251, %v251
    %v259 = vld [vmem:[#allocation4] sm:$0xf]
    %v260 = vld [vmem:[#allocation4 + $0x4] sm:$0xf]
    %v261 = vld [vmem:[#allocation4 + $0x8] sm:$0xf]
    %v262 = vld [vmem:[#allocation4 + $0xc] sm:$0xf]
    %v263 = vld [vmem:[#allocation4 + $0x10] sm:$0xf]
    %v264 = vld [vmem:[#allocation4 + $0x14] sm:$0xf]
    %v265 = vld [vmem:[#allocation4 + $0x18] sm:$0xf]
    %v266 = vld [vmem:[#allocation4 + $0x1c] sm:$0xf]
    %v267 = vld [vmem:[#allocation4 + $0x20] sm:$0xf]
    %v268 = vld [vmem:[#allocation4 + $0x24] sm:$0xf]
    %v269 = vld [vmem:[#allocation4 + $0x28] sm:$0xf]
    %v270 = vld [vmem:[#allocation4 + $0x2c] sm:$0xf]
    %v271 = vld [vmem:[#allocation4 + $0x30] sm:$0xf]
    %v272 = vld [vmem:[#allocation4 + $0x34] sm:$0xf]
    %v273 = vld [vmem:[#allocation4 + $0x38] sm:$0xf]
    %v274 = vld [vmem:[#allocation4 + $0x3c] sm:$0xf]
    %v275 = vlaneseq
    %v276 = vshrl.u32 %v275, 7
    %v277 = vsub.s32 0, %v276
    %v278 = vrot.slane %v256, %v277
    %v295 = vunpack.c.l.b16 %v259
    %v296 = vunpack.c.l.b16 %v260
    %v297 = vunpack.c.l.b16 %v261
    %v298 = vunpack.c.l.b16 %v262
    %v299 = vunpack.c.l.b16 %v263
    %v300 = vunpack.c.l.b16 %v264
    %v301 = vunpack.c.l.b16 %v265
    %v302 = vunpack.c.l.b16 %v266
    %v303 = vunpack.c.l.b16 %v267
    %v304 = vunpack.c.l.b16 %v268
    %v305 = vunpack.c.l.b16 %v269
    %v306 = vunpack.c.l.b16 %v270
    %v307 = vunpack.c.l.b16 %v271
    %v308 = vunpack.c.l.b16 %v272
    %v309 = vunpack.c.l.b16 %v273
    %v310 = vunpack.c.l.b16 %v274
    %v311 = vpack.c.b16 %v296, %v295
    %v312 = vpack.c.b16 %v298, %v297
    %v313 = vpack.c.b16 %v300, %v299
    %v314 = vpack.c.b16 %v302, %v301
    %v315 = vpack.c.b16 %v304, %v303
    %v316 = vpack.c.b16 %v306, %v305
    %v317 = vpack.c.b16 %v308, %v307
    %v318 = vpack.c.b16 %v310, %v309
    %327 = vmatprep.subr.bf16.mxu0 0
    %328 = vmatpush1.bf16.msra.mxu0 %v318
    %329 = vmatprep.subr.bf16.mxu0 0
    %330 = vmatpush1.bf16.msra.mxu0 %v317
    %331 = vmatprep.subr.bf16.mxu0 0
    %332 = vmatpush1.bf16.msra.mxu0 %v316
    %333 = vmatprep.subr.bf16.mxu0 0
    %334 = vmatpush1.bf16.msra.mxu0 %v315
    %335 = vmatprep.subr.bf16.mxu0 0
    %336 = vmatpush1.bf16.msra.mxu0 %v314
    %337 = vmatprep.subr.bf16.mxu0 0
    %338 = vmatpush1.bf16.msra.mxu0 %v313
    %339 = vmatprep.subr.bf16.mxu0 0
    %340 = vmatpush1.bf16.msra.mxu0 %v312
    %341 = vmatprep.subr.bf16.mxu0 0
    %342 = vmatpush1.bf16.msra.mxu0 %v311
    %343 = vmatprep.subr.bf16.mxu0 0
    %344 = vmatpush2.bf16.msra.mxu0 0
    %345 = vmatprep.subr.bf16.mxu0 0
    %346 = vmatpush2.bf16.msra.mxu0 0
    %347 = vmatprep.subr.bf16.mxu0 0
    %348 = vmatpush2.bf16.msra.mxu0 0
    %349 = vmatprep.subr.bf16.mxu0 0
    %350 = vmatpush2.bf16.msra.mxu0 0
    %351 = vmatprep.subr.bf16.mxu0 0
    %352 = vmatpush2.bf16.msra.mxu0 0
    %353 = vmatprep.subr.bf16.mxu0 0
    %354 = vmatpush2.bf16.msra.mxu0 0
    %355 = vmatprep.subr.bf16.mxu0 0
    %356 = vmatpush2.bf16.msra.mxu0 0
    %357 = vmatprep.subr.bf16.mxu0 0
    %358 = vmatpush2.bf16.msra.mxu0 0
    %359 = vmatprep.mubr.bf16.mxu0 0
    %360 = vmatmul.mubr.bf16.gmra.mxu0 %v258
    %v361 = vpop.f32.mrf.mxu0
    %v362 = vadd.f32 %v278, %v361
    %v363 = vpop.f32.mrf.mxu0
    %v364 = vpop.f32.mrf.mxu0
    %v365 = vpop.f32.mrf.mxu0
    %366 = vdwg.mxu0
    %367 = vadd.xlane.f32.xlu0 %v362
    %v368 = vpop.xlane.xlu0 %367
    %v369 = vmul.f32 %v362, %v362
    %370 = vadd.xlane.f32.xlu0 %v369
    %v371 = vpop.xlane.xlu0 %370
    %v372 = vmul.f32 %v368, 0.0078125
    %v373 = vmul.f32 %v371, 0.0078125
    %v374 = vmul.f32 %v372, %v372
    %v375 = vsub.f32 %v373, %v374
    %v376 = vsub.f32 %v362, %v372
    %v377 = vadd.f32 %v375, 1e-05
    %v378 = vrsqrt.pop %v377
    %v379 = vmul.f32 %v376, %v378
    %v380 = vlaneseq
    %v381 = vshrl.u32 %v380, 7
    %v382 = vsub.s32 3, %v381
    %v383 = vrot.slane %v256, %v382
    %v384 = vmul.f32 %v379, %v383
    %v385 = vlaneseq
    %v386 = vshrl.u32 %v385, 7
    %v387 = vsub.s32 6, %v386
    %v388 = vrot.slane %v256, %v387
    %v389 = vadd.f32 %v384, %v388
    %v390 = vmax.f32 %v389, 0.0
    %v391 = vpack.c.bf16 %v390, %v390
    %s392 = scalar_lea.vmem [#allocation4], 64
    %v393 = vld [vmem:[%s392] sm:$0xf]
    %v394 = vld [vmem:[%s392 + $0x4] sm:$0xf]
    %v395 = vld [vmem:[%s392 + $0x8] sm:$0xf]
    %v396 = vld [vmem:[%s392 + $0xc] sm:$0xf]
    %v397 = vld [vmem:[%s392 + $0x10] sm:$0xf]
    %v398 = vld [vmem:[%s392 + $0x14] sm:$0xf]
    %v399 = vld [vmem:[%s392 + $0x18] sm:$0xf]
    %v400 = vld [vmem:[%s392 + $0x1c] sm:$0xf]
    %v401 = vld [vmem:[%s392 + $0x20] sm:$0xf]
    %v402 = vld [vmem:[%s392 + $0x24] sm:$0xf]
    %v403 = vld [vmem:[%s392 + $0x28] sm:$0xf]
    %v404 = vld [vmem:[%s392 + $0x2c] sm:$0xf]
    %v405 = vld [vmem:[%s392 + $0x30] sm:$0xf]
    %v406 = vld [vmem:[%s392 + $0x34] sm:$0xf]
    %v407 = vld [vmem:[%s392 + $0x38] sm:$0xf]
    %v408 = vld [vmem:[%s392 + $0x3c] sm:$0xf]
    %v409 = vlaneseq
    %v410 = vshrl.u32 %v409, 7
    %v411 = vsub.s32 1, %v410
    %v412 = vrot.slane %v256, %v411
    %v429 = vunpack.c.l.b16 %v393
    %v430 = vunpack.c.l.b16 %v394
    %v431 = vunpack.c.l.b16 %v395
    %v432 = vunpack.c.l.b16 %v396
    %v433 = vunpack.c.l.b16 %v397
    %v434 = vunpack.c.l.b16 %v398
    %v435 = vunpack.c.l.b16 %v399
    %v436 = vunpack.c.l.b16 %v400
    %v437 = vunpack.c.l.b16 %v401
    %v438 = vunpack.c.l.b16 %v402
    %v439 = vunpack.c.l.b16 %v403
    %v440 = vunpack.c.l.b16 %v404
    %v441 = vunpack.c.l.b16 %v405
    %v442 = vunpack.c.l.b16 %v406
    %v443 = vunpack.c.l.b16 %v407
    %v444 = vunpack.c.l.b16 %v408
    %v445 = vpack.c.b16 %v430, %v429
    %v446 = vpack.c.b16 %v432, %v431
    %v447 = vpack.c.b16 %v434, %v433
    %v448 = vpack.c.b16 %v436, %v435
    %v449 = vpack.c.b16 %v438, %v437
    %v450 = vpack.c.b16 %v440, %v439
    %v451 = vpack.c.b16 %v442, %v441
    %v452 = vpack.c.b16 %v444, %v443
    %461 = vmatprep.subr.bf16.mxu0 0
    %462 = vmatpush1.bf16.msra.mxu0 %v452
    %463 = vmatprep.subr.bf16.mxu0 0
    %464 = vmatpush1.bf16.msra.mxu0 %v451
    %465 = vmatprep.subr.bf16.mxu0 0
    %466 = vmatpush1.bf16.msra.mxu0 %v450
    %467 = vmatprep.subr.bf16.mxu0 0
    %468 = vmatpush1.bf16.msra.mxu0 %v449
    %469 = vmatprep.subr.bf16.mxu0 0
    %470 = vmatpush1.bf16.msra.mxu0 %v448
    %471 = vmatprep.subr.bf16.mxu0 0
    %472 = vmatpush1.bf16.msra.mxu0 %v447
    %473 = vmatprep.subr.bf16.mxu0 0
    %474 = vmatpush1.bf16.msra.mxu0 %v446
    %475 = vmatprep.subr.bf16.mxu0 0
    %476 = vmatpush1.bf16.msra.mxu0 %v445
    %477 = vmatprep.subr.bf16.mxu0 0
    %478 = vmatpush2.bf16.msra.mxu0 0
    %479 = vmatprep.subr.bf16.mxu0 0
    %480 = vmatpush2.bf16.msra.mxu0 0
    %481 = vmatprep.subr.bf16.mxu0 0
    %482 = vmatpush2.bf16.msra.mxu0 0
    %483 = vmatprep.subr.bf16.mxu0 0
    %484 = vmatpush2.bf16.msra.mxu0 0
    %485 = vmatprep.subr.bf16.mxu0 0
    %486 = vmatpush2.bf16.msra.mxu0 0
    %487 = vmatprep.subr.bf16.mxu0 0
    %488 = vmatpush2.bf16.msra.mxu0 0
    %489 = vmatprep.subr.bf16.mxu0 0
    %490 = vmatpush2.bf16.msra.mxu0 0
    %491 = vmatprep.subr.bf16.mxu0 0
    %492 = vmatpush2.bf16.msra.mxu0 0
    %493 = vmatprep.mubr.bf16.mxu0 0
    %494 = vmatmul.mubr.bf16.gmra.mxu0 %v391
    %v495 = vpop.f32.mrf.mxu0
    %v496 = vadd.f32 %v412, %v495
    %v497 = vpop.f32.mrf.mxu0
    %v498 = vpop.f32.mrf.mxu0
    %v499 = vpop.f32.mrf.mxu0
    %500 = vdwg.mxu0
    %501 = vadd.xlane.f32.xlu0 %v496
    %v502 = vpop.xlane.xlu0 %501
    %v503 = vmul.f32 %v496, %v496
    %504 = vadd.xlane.f32.xlu0 %v503
    %v505 = vpop.xlane.xlu0 %504
    %v506 = vmul.f32 %v502, 0.0078125
    %v507 = vmul.f32 %v505, 0.0078125
    %v508 = vmul.f32 %v506, %v506
    %v509 = vsub.f32 %v507, %v508
    %v510 = vsub.f32 %v496, %v506
    %v511 = vadd.f32 %v509, 1e-05
    %v512 = vrsqrt.pop %v511
    %v513 = vmul.f32 %v510, %v512
    %v514 = vlaneseq
    %v515 = vshrl.u32 %v514, 7
    %v516 = vsub.s32 4, %v515
    %v517 = vrot.slane %v256, %v516
    %v518 = vmul.f32 %v513, %v517
    %v519 = vlaneseq
    %v520 = vshrl.u32 %v519, 7
    %v521 = vsub.s32 7, %v520
    %v522 = vrot.slane %v256, %v521
    %v523 = vadd.f32 %v518, %v522
    %v524 = vmax.f32 %v523, 0.0
    %v525 = vpack.c.bf16 %v524, %v524
    %s526 = scalar_lea.vmem [#allocation4], 128
    %v527 = vld [vmem:[%s526] sm:$0xf]
    %v528 = vld [vmem:[%s526 + $0x4] sm:$0xf]
    %v529 = vld [vmem:[%s526 + $0x8] sm:$0xf]
    %v530 = vld [vmem:[%s526 + $0xc] sm:$0xf]
    %v531 = vld [vmem:[%s526 + $0x10] sm:$0xf]
    %v532 = vld [vmem:[%s526 + $0x14] sm:$0xf]
    %v533 = vld [vmem:[%s526 + $0x18] sm:$0xf]
    %v534 = vld [vmem:[%s526 + $0x1c] sm:$0xf]
    %v535 = vld [vmem:[%s526 + $0x20] sm:$0xf]
    %v536 = vld [vmem:[%s526 + $0x24] sm:$0xf]
    %v537 = vld [vmem:[%s526 + $0x28] sm:$0xf]
    %v538 = vld [vmem:[%s526 + $0x2c] sm:$0xf]
    %v539 = vld [vmem:[%s526 + $0x30] sm:$0xf]
    %v540 = vld [vmem:[%s526 + $0x34] sm:$0xf]
    %v541 = vld [vmem:[%s526 + $0x38] sm:$0xf]
    %v542 = vld [vmem:[%s526 + $0x3c] sm:$0xf]
    %v543 = vlaneseq
    %v544 = vshrl.u32 %v543, 7
    %v545 = vsub.s32 2, %v544
    %v546 = vrot.slane %v256, %v545
    %v563 = vunpack.c.l.b16 %v527
    %v564 = vunpack.c.l.b16 %v528
    %v565 = vunpack.c.l.b16 %v529
    %v566 = vunpack.c.l.b16 %v530
    %v567 = vunpack.c.l.b16 %v531
    %v568 = vunpack.c.l.b16 %v532
    %v569 = vunpack.c.l.b16 %v533
    %v570 = vunpack.c.l.b16 %v534
    %v571 = vunpack.c.l.b16 %v535
    %v572 = vunpack.c.l.b16 %v536
    %v573 = vunpack.c.l.b16 %v537
    %v574 = vunpack.c.l.b16 %v538
    %v575 = vunpack.c.l.b16 %v539
    %v576 = vunpack.c.l.b16 %v540
    %v577 = vunpack.c.l.b16 %v541
    %v578 = vunpack.c.l.b16 %v542
    %v579 = vpack.c.b16 %v564, %v563
    %v580 = vpack.c.b16 %v566, %v565
    %v581 = vpack.c.b16 %v568, %v567
    %v582 = vpack.c.b16 %v570, %v569
    %v583 = vpack.c.b16 %v572, %v571
    %v584 = vpack.c.b16 %v574, %v573
    %v585 = vpack.c.b16 %v576, %v575
    %v586 = vpack.c.b16 %v578, %v577
    %595 = vmatprep.subr.bf16.mxu0 0
    %596 = vmatpush1.bf16.msra.mxu0 %v586
    %597 = vmatprep.subr.bf16.mxu0 0
    %598 = vmatpush1.bf16.msra.mxu0 %v585
    %599 = vmatprep.subr.bf16.mxu0 0
    %600 = vmatpush1.bf16.msra.mxu0 %v584
    %601 = vmatprep.subr.bf16.mxu0 0
    %602 = vmatpush1.bf16.msra.mxu0 %v583
    %603 = vmatprep.subr.bf16.mxu0 0
    %604 = vmatpush1.bf16.msra.mxu0 %v582
    %605 = vmatprep.subr.bf16.mxu0 0
    %606 = vmatpush1.bf16.msra.mxu0 %v581
    %607 = vmatprep.subr.bf16.mxu0 0
    %608 = vmatpush1.bf16.msra.mxu0 %v580
    %609 = vmatprep.subr.bf16.mxu0 0
    %610 = vmatpush1.bf16.msra.mxu0 %v579
    %611 = vmatprep.subr.bf16.mxu0 0
    %612 = vmatpush2.bf16.msra.mxu0 0
    %613 = vmatprep.subr.bf16.mxu0 0
    %614 = vmatpush2.bf16.msra.mxu0 0
    %615 = vmatprep.subr.bf16.mxu0 0
    %616 = vmatpush2.bf16.msra.mxu0 0
    %617 = vmatprep.subr.bf16.mxu0 0
    %618 = vmatpush2.bf16.msra.mxu0 0
    %619 = vmatprep.subr.bf16.mxu0 0
    %620 = vmatpush2.bf16.msra.mxu0 0
    %621 = vmatprep.subr.bf16.mxu0 0
    %622 = vmatpush2.bf16.msra.mxu0 0
    %623 = vmatprep.subr.bf16.mxu0 0
    %624 = vmatpush2.bf16.msra.mxu0 0
    %625 = vmatprep.subr.bf16.mxu0 0
    %626 = vmatpush2.bf16.msra.mxu0 0
    %627 = vmatprep.mubr.bf16.mxu0 0
    %628 = vmatmul.mubr.bf16.gmra.mxu0 %v525
    %v629 = vpop.f32.mrf.mxu0
    %v630 = vadd.f32 %v546, %v629
    %v631 = vpop.f32.mrf.mxu0
    %v632 = vpop.f32.mrf.mxu0
    %v633 = vpop.f32.mrf.mxu0
    %634 = vdwg.mxu0
    %635 = vadd.xlane.f32.xlu0 %v630
    %v636 = vpop.xlane.xlu0 %635
    %v637 = vmul.f32 %v630, %v630
    %638 = vadd.xlane.f32.xlu0 %v637
    %v639 = vpop.xlane.xlu0 %638
    %v640 = vmul.f32 %v636, 0.0078125
    %v641 = vmul.f32 %v639, 0.0078125
    %v642 = vmul.f32 %v640, %v640
    %v643 = vsub.f32 %v641, %v642
    %v644 = vsub.f32 %v630, %v640
    %v645 = vadd.f32 %v643, 1e-05
    %v646 = vrsqrt.pop %v645
    %v647 = vmul.f32 %v644, %v646
    %v648 = vlaneseq
    %v649 = vshrl.u32 %v648, 7
    %v650 = vsub.s32 5, %v649
    %v651 = vrot.slane %v256, %v650
    %v652 = vmul.f32 %v647, %v651
    %v653 = vlaneseq
    %v654 = vshrl.u32 %v653, 7
    %v655 = vsub.s32 0, %v654
    %v656 = vrot.slane %v257, %v655
    %v657 = vadd.f32 %v652, %v656
    %v658 = vmax.f32 %v657, 0.0
    %v659 = vpack.c.bf16 %v658, %v658
    %v660 = vld [vmem:[#allocation6] sm:$0xff]
    %v661 = vld [vmem:[#allocation6 + $0x8] sm:$0xff]
    %v662 = vld [vmem:[#allocation6 + $0x10] sm:$0xf]
    %v663 = vld [vmem:[#allocation6 + $0x14] sm:$0xff]
    %v664 = vld [vmem:[#allocation6 + $0x1c] sm:$0xff]
    %v665 = vld [vmem:[#allocation6 + $0x24] sm:$0xf]
    %v666 = vld [vmem:[#allocation6 + $0x28] sm:$0xff]
    %v667 = vld [vmem:[#allocation6 + $0x30] sm:$0xff]
    %v668 = vld [vmem:[#allocation6 + $0x38] sm:$0xf]
    %v669 = vld [vmem:[#allocation6 + $0x3c] sm:$0xff]
    %v670 = vld [vmem:[#allocation6 + $0x44] sm:$0xff]
    %v671 = vld [vmem:[#allocation6 + $0x4c] sm:$0xf]
    %v672 = vld [vmem:[#allocation6 + $0x50] sm:$0xff]
    %v673 = vld [vmem:[#allocation6 + $0x58] sm:$0xff]
    %v674 = vld [vmem:[#allocation6 + $0x60] sm:$0xf]
    %v675 = vld [vmem:[#allocation6 + $0x64] sm:$0xff]
    %v676 = vld [vmem:[#allocation6 + $0x6c] sm:$0xff]
    %v677 = vld [vmem:[#allocation6 + $0x74] sm:$0xf]
    %v678 = vld [vmem:[#allocation6 + $0x78] sm:$0xff]
    %v679 = vld [vmem:[#allocation6 + $0x80] sm:$0xff]
    %v680 = vld [vmem:[#allocation6 + $0x88] sm:$0xf]
    %v681 = vld [vmem:[#allocation6 + $0x8c] sm:$0xff]
    %v682 = vld [vmem:[#allocation6 + $0x94] sm:$0xff]
    %v683 = vld [vmem:[#allocation6 + $0x9c] sm:$0xf]
    %v684 = vld [vmem:[#allocation6 + $0xa0] sm:$0xff]
    %v685 = vld [vmem:[#allocation6 + $0xa8] sm:$0xff]
    %v686 = vld [vmem:[#allocation6 + $0xb0] sm:$0xf]
    %v687 = vld [vmem:[#allocation6 + $0xb4] sm:$0xff]
    %v688 = vld [vmem:[#allocation6 + $0xbc] sm:$0xff]
    %v689 = vld [vmem:[#allocation6 + $0xc4] sm:$0xf]
    %v690 = vld [vmem:[#allocation6 + $0xc8] sm:$0xff]
    %v691 = vld [vmem:[#allocation6 + $0xd0] sm:$0xff]
    %v692 = vld [vmem:[#allocation6 + $0xd8] sm:$0xf]
    %v693 = vld [vmem:[#allocation6 + $0xdc] sm:$0xff]
    %v694 = vld [vmem:[#allocation6 + $0xe4] sm:$0xff]
    %v695 = vld [vmem:[#allocation6 + $0xec] sm:$0xf]
    %v696 = vld [vmem:[#allocation6 + $0xf0] sm:$0xff]
    %v697 = vld [vmem:[#allocation6 + $0xf8] sm:$0xff]
    %v698 = vld [vmem:[#allocation6 + $0x100] sm:$0xf]
    %v699 = vld [vmem:[#allocation6 + $0x104] sm:$0xff]
    %v700 = vld [vmem:[#allocation6 + $0x10c] sm:$0xff]
    %v701 = vld [vmem:[#allocation6 + $0x114] sm:$0xf]
    %v702 = vld [vmem:[#allocation6 + $0x118] sm:$0xff]
    %v703 = vld [vmem:[#allocation6 + $0x120] sm:$0xff]
    %v704 = vld [vmem:[#allocation6 + $0x128] sm:$0xf]
    %v705 = vld [vmem:[#allocation6 + $0x12c] sm:$0xff]
    %v706 = vld [vmem:[#allocation6 + $0x134] sm:$0xff]
    %v707 = vld [vmem:[#allocation6 + $0x13c] sm:$0xf]
    %v756 = vunpack.c.l.b16 %v660
    %v757 = vunpack.c.h.b16 %v660
    %v758 = vunpack.c.l.b16 %v661
    %v759 = vunpack.c.h.b16 %v661
    %v760 = vunpack.c.l.b16 %v662
    %v761 = vunpack.c.l.b16 %v663
    %v762 = vunpack.c.h.b16 %v663
    %v763 = vunpack.c.l.b16 %v664
    %v764 = vunpack.c.h.b16 %v664
    %v765 = vunpack.c.l.b16 %v665
    %v766 = vunpack.c.l.b16 %v666
    %v767 = vunpack.c.h.b16 %v666
    %v768 = vunpack.c.l.b16 %v667
    %v769 = vunpack.c.h.b16 %v667
    %v770 = vunpack.c.l.b16 %v668
    %v771 = vunpack.c.l.b16 %v669
    %v772 = vunpack.c.h.b16 %v669
    %v773 = vunpack.c.l.b16 %v670
    %v774 = vunpack.c.h.b16 %v670
    %v775 = vunpack.c.l.b16 %v671
    %v776 = vunpack.c.l.b16 %v672
    %v777 = vunpack.c.h.b16 %v672
    %v778 = vunpack.c.l.b16 %v673
    %v779 = vunpack.c.h.b16 %v673
    %v780 = vunpack.c.l.b16 %v674
    %v781 = vunpack.c.l.b16 %v675
    %v782 = vunpack.c.h.b16 %v675
    %v783 = vunpack.c.l.b16 %v676
    %v784 = vunpack.c.h.b16 %v676
    %v785 = vunpack.c.l.b16 %v677
    %v786 = vunpack.c.l.b16 %v678
    %v787 = vunpack.c.h.b16 %v678
    %v788 = vunpack.c.l.b16 %v679
    %v789 = vunpack.c.h.b16 %v679
    %v790 = vunpack.c.l.b16 %v680
    %v791 = vunpack.c.l.b16 %v681
    %v792 = vunpack.c.h.b16 %v681
    %v793 = vunpack.c.l.b16 %v682
    %v794 = vunpack.c.h.b16 %v682
    %v795 = vunpack.c.l.b16 %v683
    %v796 = vunpack.c.l.b16 %v684
    %v797 = vunpack.c.h.b16 %v684
    %v798 = vunpack.c.l.b16 %v685
    %v799 = vunpack.c.h.b16 %v685
    %v800 = vunpack.c.l.b16 %v686
    %v801 = vunpack.c.l.b16 %v687
    %v802 = vunpack.c.h.b16 %v687
    %v803 = vunpack.c.l.b16 %v688
    %v804 = vunpack.c.h.b16 %v688
    %v805 = vunpack.c.l.b16 %v689
    %v806 = vunpack.c.l.b16 %v690
    %v807 = vunpack.c.h.b16 %v690
    %v808 = vunpack.c.l.b16 %v691
    %v809 = vunpack.c.h.b16 %v691
    %v810 = vunpack.c.l.b16 %v692
    %v811 = vunpack.c.l.b16 %v693
    %v812 = vunpack.c.h.b16 %v693
    %v813 = vunpack.c.l.b16 %v694
    %v814 = vunpack.c.h.b16 %v694
    %v815 = vunpack.c.l.b16 %v695
    %v816 = vunpack.c.l.b16 %v696
    %v817 = vunpack.c.h.b16 %v696
    %v818 = vunpack.c.l.b16 %v697
    %v819 = vunpack.c.h.b16 %v697
    %v820 = vunpack.c.l.b16 %v698
    %v821 = vunpack.c.l.b16 %v699
    %v822 = vunpack.c.h.b16 %v699
    %v823 = vunpack.c.l.b16 %v700
    %v824 = vunpack.c.h.b16 %v700
    %v825 = vunpack.c.l.b16 %v701
    %v826 = vunpack.c.l.b16 %v702
    %v827 = vunpack.c.h.b16 %v702
    %v828 = vunpack.c.l.b16 %v703
    %v829 = vunpack.c.h.b16 %v703
    %v830 = vunpack.c.l.b16 %v704
    %v831 = vunpack.c.l.b16 %v705
    %v832 = vunpack.c.h.b16 %v705
    %v833 = vunpack.c.l.b16 %v706
    %v834 = vunpack.c.h.b16 %v706
    %v835 = vunpack.c.l.b16 %v707
    %v836 = vpack.c.b16 %v761, %v756
    %v837 = vpack.c.b16 %v762, %v757
    %v838 = vpack.c.b16 %v763, %v758
    %v839 = vpack.c.b16 %v764, %v759
    %v840 = vpack.c.b16 %v765, %v760
    %v841 = vpack.c.b16 %v771, %v766
    %v842 = vpack.c.b16 %v772, %v767
    %v843 = vpack.c.b16 %v773, %v768
    %v844 = vpack.c.b16 %v774, %v769
    %v845 = vpack.c.b16 %v775, %v770
    %v846 = vpack.c.b16 %v781, %v776
    %v847 = vpack.c.b16 %v782, %v777
    %v848 = vpack.c.b16 %v783, %v778
    %v849 = vpack.c.b16 %v784, %v779
    %v850 = vpack.c.b16 %v785, %v780
    %v851 = vpack.c.b16 %v791, %v786
    %v852 = vpack.c.b16 %v792, %v787
    %v853 = vpack.c.b16 %v793, %v788
    %v854 = vpack.c.b16 %v794, %v789
    %v855 = vpack.c.b16 %v795, %v790
    %v856 = vpack.c.b16 %v801, %v796
    %v857 = vpack.c.b16 %v802, %v797
    %v858 = vpack.c.b16 %v803, %v798
    %v859 = vpack.c.b16 %v804, %v799
    %v860 = vpack.c.b16 %v805, %v800
    %v861 = vpack.c.b16 %v811, %v806
    %v862 = vpack.c.b16 %v812, %v807
    %v863 = vpack.c.b16 %v813, %v808
    %v864 = vpack.c.b16 %v814, %v809
    %v865 = vpack.c.b16 %v815, %v810
    %v866 = vpack.c.b16 %v821, %v816
    %v867 = vpack.c.b16 %v822, %v817
    %v868 = vpack.c.b16 %v823, %v818
    %v869 = vpack.c.b16 %v824, %v819
    %v870 = vpack.c.b16 %v825, %v820
    %v871 = vpack.c.b16 %v831, %v826
    %v872 = vpack.c.b16 %v832, %v827
    %v873 = vpack.c.b16 %v833, %v828
    %v874 = vpack.c.b16 %v834, %v829
    %v875 = vpack.c.b16 %v835, %v830
    %916 = vmatprep.subr.bf16.mxu0 %v872
    %917 = vmatpush1.bf16.msra.mxu0 %v871
    %918 = vmatprep.subr.bf16.mxu0 %v867
    %919 = vmatpush1.bf16.msra.mxu0 %v866
    %920 = vmatprep.subr.bf16.mxu0 %v862
    %921 = vmatpush1.bf16.msra.mxu0 %v861
    %922 = vmatprep.subr.bf16.mxu0 %v857
    %923 = vmatpush1.bf16.msra.mxu0 %v856
    %924 = vmatprep.subr.bf16.mxu0 %v852
    %925 = vmatpush1.bf16.msra.mxu0 %v851
    %926 = vmatprep.subr.bf16.mxu0 %v847
    %927 = vmatpush1.bf16.msra.mxu0 %v846
    %928 = vmatprep.subr.bf16.mxu0 %v842
    %929 = vmatpush1.bf16.msra.mxu0 %v841
    %930 = vmatprep.subr.bf16.mxu0 %v837
    %931 = vmatpush1.bf16.msra.mxu0 %v836
    %932 = vmatprep.subr.bf16.mxu0 0
    %933 = vmatpush2.bf16.msra.mxu0 0
    %934 = vmatprep.subr.bf16.mxu0 0
    %935 = vmatpush2.bf16.msra.mxu0 0
    %936 = vmatprep.subr.bf16.mxu0 0
    %937 = vmatpush2.bf16.msra.mxu0 0
    %938 = vmatprep.subr.bf16.mxu0 0
    %939 = vmatpush2.bf16.msra.mxu0 0
    %940 = vmatprep.subr.bf16.mxu0 0
    %941 = vmatpush2.bf16.msra.mxu0 0
    %942 = vmatprep.subr.bf16.mxu0 0
    %943 = vmatpush2.bf16.msra.mxu0 0
    %944 = vmatprep.subr.bf16.mxu0 0
    %945 = vmatpush2.bf16.msra.mxu0 0
    %946 = vmatprep.subr.bf16.mxu0 0
    %947 = vmatpush2.bf16.msra.mxu0 0
    %948 = vmatprep.mubr.bf16.mxu0 0
    %949 = vmatmul.mubr.bf16.gmra.mxu0 %v659
    %v950 = vpop.f32.mrf.mxu0
    %v951 = vadd.f32 0.0, %v950
    %v952 = vpop.f32.mrf.mxu0
    %v953 = vadd.f32 0.0, %v952
    %v954 = vpop.f32.mrf.mxu0
    %v955 = vpop.f32.mrf.mxu0
    %956 = vdwg.mxu0
    %957 = vmatprep.subr.bf16.mxu0 %v874
    %958 = vmatpush1.bf16.msra.mxu0 %v873
    %959 = vmatprep.subr.bf16.mxu0 %v869
    %960 = vmatpush1.bf16.msra.mxu0 %v868
    %961 = vmatprep.subr.bf16.mxu0 %v864
    %962 = vmatpush1.bf16.msra.mxu0 %v863
    %963 = vmatprep.subr.bf16.mxu0 %v859
    %964 = vmatpush1.bf16.msra.mxu0 %v858
    %965 = vmatprep.subr.bf16.mxu0 %v854
    %966 = vmatpush1.bf16.msra.mxu0 %v853
    %967 = vmatprep.subr.bf16.mxu0 %v849
    %968 = vmatpush1.bf16.msra.mxu0 %v848
    %969 = vmatprep.subr.bf16.mxu0 %v844
    %970 = vmatpush1.bf16.msra.mxu0 %v843
    %971 = vmatprep.subr.bf16.mxu0 %v839
    %972 = vmatpush1.bf16.msra.mxu0 %v838
    %973 = vmatprep.subr.bf16.mxu0 0
    %974 = vmatpush2.bf16.msra.mxu0 0
    %975 = vmatprep.subr.bf16.mxu0 0
    %976 = vmatpush2.bf16.msra.mxu0 0
    %977 = vmatprep.subr.bf16.mxu0 0
    %978 = vmatpush2.bf16.msra.mxu0 0
    %979 = vmatprep.subr.bf16.mxu0 0
    %980 = vmatpush2.bf16.msra.mxu0 0
    %981 = vmatprep.subr.bf16.mxu0 0
    %982 = vmatpush2.bf16.msra.mxu0 0
    %983 = vmatprep.subr.bf16.mxu0 0
    %984 = vmatpush2.bf16.msra.mxu0 0
    %985 = vmatprep.subr.bf16.mxu0 0
    %986 = vmatpush2.bf16.msra.mxu0 0
    %987 = vmatprep.subr.bf16.mxu0 0
    %988 = vmatpush2.bf16.msra.mxu0 0
    %989 = vmatprep.mubr.bf16.mxu0 0
    %990 = vmatmul.mubr.bf16.gmra.mxu0 %v659
    %v991 = vpop.f32.mrf.mxu0
    %v992 = vadd.f32 0.0, %v991
    %v993 = vpop.f32.mrf.mxu0
    %v994 = vadd.f32 0.0, %v993
    %v995 = vpop.f32.mrf.mxu0
    %v996 = vpop.f32.mrf.mxu0
    %997 = vdwg.mxu0
    %998 = vmatprep.subr.bf16.mxu0 0
    %999 = vmatpush1.bf16.msra.mxu0 %v875
    %1000 = vmatprep.subr.bf16.mxu0 0
    %1001 = vmatpush1.bf16.msra.mxu0 %v870
    %1002 = vmatprep.subr.bf16.mxu0 0
    %1003 = vmatpush1.bf16.msra.mxu0 %v865
    %1004 = vmatprep.subr.bf16.mxu0 0
    %1005 = vmatpush1.bf16.msra.mxu0 %v860
    %1006 = vmatprep.subr.bf16.mxu0 0
    %1007 = vmatpush1.bf16.msra.mxu0 %v855
    %1008 = vmatprep.subr.bf16.mxu0 0
    %1009 = vmatpush1.bf16.msra.mxu0 %v850
    %1010 = vmatprep.subr.bf16.mxu0 0
    %1011 = vmatpush1.bf16.msra.mxu0 %v845
    %1012 = vmatprep.subr.bf16.mxu0 0
    %1013 = vmatpush1.bf16.msra.mxu0 %v840
    %1014 = vmatprep.subr.bf16.mxu0 0
    %1015 = vmatpush2.bf16.msra.mxu0 0
    %1016 = vmatprep.subr.bf16.mxu0 0
    %1017 = vmatpush2.bf16.msra.mxu0 0
    %1018 = vmatprep.subr.bf16.mxu0 0
    %1019 = vmatpush2.bf16.msra.mxu0 0
    %1020 = vmatprep.subr.bf16.mxu0 0
    %1021 = vmatpush2.bf16.msra.mxu0 0
    %1022 = vmatprep.subr.bf16.mxu0 0
    %1023 = vmatpush2.bf16.msra.mxu0 0
    %1024 = vmatprep.subr.bf16.mxu0 0
    %1025 = vmatpush2.bf16.msra.mxu0 0
    %1026 = vmatprep.subr.bf16.mxu0 0
    %1027 = vmatpush2.bf16.msra.mxu0 0
    %1028 = vmatprep.subr.bf16.mxu0 0
    %1029 = vmatpush2.bf16.msra.mxu0 0
    %1030 = vmatprep.mubr.bf16.mxu0 0
    %1031 = vmatmul.mubr.bf16.gmra.mxu0 %v659
    %v1032 = vpop.f32.mrf.mxu0
    %v1033 = vadd.f32 0.0, %v1032
    %v1034 = vpop.f32.mrf.mxu0
    %v1035 = vpop.f32.mrf.mxu0
    %v1036 = vpop.f32.mrf.mxu0
    %1037 = vdwg.mxu0
    %1039 = vset.pattern.permute.xlu0 0
    %1040 = vperm.xlu0 %1039, %v98
    %v1041 = vpop.permute.xlu0 %1040
    %v1043 = vmul.f32 %v1041, %v951
    %v1045 = vrot.slane %v257, 1
    %vm1046 = vcmask 39936
    %v1047 = vsel %vm1046, %v98, 0
    %vm1049 = vcmask 1044480
    %v1050 = vsel %vm1049, %v1045, 0
    %1052 = vmatprep.subr.mxu0 0.0
    %1053 = vmatpush1.msra.mxu0 0.0
    %1054 = vmatprep.subr.mxu0 0.0
    %1055 = vmatpush1.msra.mxu0 0.0
    %1056 = vmatprep.subr.mxu0 0.0
    %1057 = vmatpush1.msra.mxu0 0.0
    %1058 = vmatprep.subr.mxu0 0.0
    %1059 = vmatpush1.msra.mxu0 0.0
    %1060 = vmatprep.subr.mxu0 0.0
    %1061 = vmatpush1.msra.mxu0 0.0
    %1062 = vmatprep.subr.mxu0 0.0
    %1063 = vmatpush1.msra.mxu0 0.0
    %1064 = vmatprep.subr.mxu0 0.0
    %1065 = vmatpush1.msra.mxu0 0.0
    %1066 = vmatprep.subr.mxu0 0.0
    %1067 = vmatpush1.msra.mxu0 0.0
    %1068 = vmatprep.subr.mxu0 0.0
    %1069 = vmatpush1.msra.mxu0 0.0
    %1070 = vmatprep.subr.mxu0 0.0
    %1071 = vmatpush1.msra.mxu0 0.0
    %1072 = vmatprep.subr.mxu0 0.0
    %1073 = vmatpush1.msra.mxu0 0.0
    %1074 = vmatprep.subr.mxu0 0.0
    %1075 = vmatpush1.msra.mxu0 0.0
    %1076 = vmatprep.subr.mxu0 0.0
    %1077 = vmatpush1.msra.mxu0 0.0
    %1078 = vmatprep.subr.mxu0 0.0
    %1079 = vmatpush1.msra.mxu0 0.0
    %1080 = vmatprep.subr.mxu0 0.0
    %1081 = vmatpush1.msra.mxu0 0.0
    %1082 = vmatprep.subr.mxu0 0.0
    %1083 = vmatpush1.msra.mxu0 %v1050
    %1084 = vmatprep.subr.mxu0 0.0
    %1085 = vmatpush2.msra.mxu0 0.0
    %1086 = vmatprep.subr.mxu0 0.0
    %1087 = vmatpush2.msra.mxu0 0.0
    %1088 = vmatprep.subr.mxu0 0.0
    %1089 = vmatpush2.msra.mxu0 0.0
    %1090 = vmatprep.subr.mxu0 0.0
    %1091 = vmatpush2.msra.mxu0 0.0
    %1092 = vmatprep.subr.mxu0 0.0
    %1093 = vmatpush2.msra.mxu0 0.0
    %1094 = vmatprep.subr.mxu0 0.0
    %1095 = vmatpush2.msra.mxu0 0.0
    %1096 = vmatprep.subr.mxu0 0.0
    %1097 = vmatpush2.msra.mxu0 0.0
    %1098 = vmatprep.subr.mxu0 0.0
    %1099 = vmatpush2.msra.mxu0 0.0
    %1100 = vmatprep.subr.mxu0 0.0
    %1101 = vmatpush2.msra.mxu0 0.0
    %1102 = vmatprep.subr.mxu0 0.0
    %1103 = vmatpush2.msra.mxu0 0.0
    %1104 = vmatprep.subr.mxu0 0.0
    %1105 = vmatpush2.msra.mxu0 0.0
    %1106 = vmatprep.subr.mxu0 0.0
    %1107 = vmatpush2.msra.mxu0 0.0
    %1108 = vmatprep.subr.mxu0 0.0
    %1109 = vmatpush2.msra.mxu0 0.0
    %1110 = vmatprep.subr.mxu0 0.0
    %1111 = vmatpush2.msra.mxu0 0.0
    %1112 = vmatprep.subr.mxu0 0.0
    %1113 = vmatpush2.msra.mxu0 0.0
    %1114 = vmatprep.subr.mxu0 0.0
    %1115 = vmatpush2.msra.mxu0 0.0
    %1116 = vmatprep.mubr.f32.mxu0 0.0
    %1117 = vmatmul.mubr.f32.gmra.mxu0 %v1047
    %v1118 = vpop.f32.mrf.mxu0
    %v1119 = vadd.f32 %v1043, %v1118
    %v1120 = vpop.f32.mrf.mxu0
    %1121 = vdwg.mxu0
    %1122 = vset.pattern.permute.xlu0 1
    %1123 = vperm.xlu0 %1122, %v98
    %v1124 = vpop.permute.xlu0 %1123
    %v1126 = vmul.f32 %v1124, %v953
    %v1127 = vadd.f32 %v1119, %v1126
    %1128 = vset.pattern.permute.xlu0 2
    %1129 = vperm.xlu0 %1128, %v98
    %v1130 = vpop.permute.xlu0 %1129
    %v1132 = vmul.f32 %v1130, %v992
    %v1133 = vadd.f32 %v1127, %v1132
    %1134 = vset.pattern.permute.xlu0 3
    %1135 = vperm.xlu0 %1134, %v98
    %v1136 = vpop.permute.xlu0 %1135
    %v1138 = vmul.f32 %v1136, %v994
    %v1139 = vadd.f32 %v1133, %v1138
    %1140 = vset.pattern.permute.xlu0 4
    %1141 = vperm.xlu0 %1140, %v98
    %v1142 = vpop.permute.xlu0 %1141
    %v1144 = vmul.f32 %v1142, %v1033
    %v1145 = vadd.f32 %v1139, %v1144
    %1146 = vst [vmem:[%s7] sm:$0xff] %v658
    %1147 = vst [vmem:[%s7 + $0x8] sm:$0xff] %v1145
    // Predicated region
    $region46: #{task_aware_policy_forward.1} parent=1 // pred_check
      _
    $region47: #{task_aware_policy_forward.1} parent=1 // pred_check_branch
      %1149 = sbr.rel (0) target = $region49
    $region48: #{task_aware_policy_forward.1} parent=1 // pred_region
      _
    $region49: #{task_aware_policy_forward.1} parent=1 // pred_fallthru
      _
    // Predicated region
    $region50: #{task_aware_policy_forward.1} parent=1 // pred_check
      _
    $region51: #{task_aware_policy_forward.1} parent=1 // pred_check_branch
      %1151 = sbr.rel (0) target = $region53
    $region52: #{task_aware_policy_forward.1} parent=1 // pred_region
      _
    $region53: #{task_aware_policy_forward.1} parent=1 // pred_fallthru
      _
    %1152 = vsyncpa [#allocation3], 1
    %1153 = vsyncpa [#allocation5], 1
    %1154 = vsyncpa [#allocation8], 1

</llo_original>
